<compile_context>
chip_gen: v7x
topology: tpu7x:2x2x1
jax: 0.10.0
libtpu: 0.0.40
codegen_flags: <defaults>
</compile_context>

<pallas_src>
import jax
import jax.numpy as jnp
from jax import lax
from jax.experimental import pallas as pl
from jax.experimental.pallas import tpu as pltpu

LAMBDA_SMOOTH = 0.5

# Module buffers (baked constants) -- kept for the pure-JAX reference.
SOBEL_X = ((-1.0, 0.0, 1.0), (-2.0, 0.0, 2.0), (-1.0, 0.0, 1.0))
SOBEL_Y = ((-1.0, -2.0, -1.0), (0.0, 0.0, 0.0), (1.0, 2.0, 1.0))
MEAN_K = ((1/25, 1/25, 1/25, 1/25, 1/25),
          (1/25, 1/10, 1/10, 1/10, 1/25),
          (1/25, 1/10, 1/5,  1/10, 1/25),
          (1/25, 1/10, 1/10, 1/10, 1/25),
          (1/25, 1/25, 1/25, 1/25, 1/25))


def _make_kernel(C, H, W):
    HW = H * W

    def kernel(col_ref, orig_ref, trans_ref, out_ref):
        orig = orig_ref[0].astype(jnp.float32)     # (C, HW)
        trans = trans_ref[0].astype(jnp.float32)   # (C, HW)
        col = col_ref[...]                         # (1, HW) int32: column index j of each lane
        lane = lax.broadcasted_iota(jnp.int32, (1, HW), 1)   # flat index i*W + j

        # Zero-pad validity masks for shifted taps (computed once, reused everywhere).
        cm = {d: ((col + d >= 0) & (col + d <= W - 1)).astype(jnp.float32)
              for d in (-2, -1, 1, 2)}
        rm = {d: ((lane + d * W >= 0) & (lane + d * W <= HW - 1)).astype(jnp.float32)
              for d in (-2, -1, 1, 2)}

        def hshift(x, dx):   # y[., i*W+j] = x2d[., i, j+dx], zero outside the row
            return pltpu.roll(x, shift=(-dx) % HW, axis=1) * cm[dx]

        def vshift(x, dy):   # y[., i*W+j] = x2d[., i+dy, j], zero outside the image
            return pltpu.roll(x, shift=(-dy * W) % HW, axis=1) * rm[dy]

        # ---- edge mask: gray -> Sobel (separable) -> 5x5 mean blur x2 (separable) -> clamp
        gray = orig[0:1, :]
        for c in range(1, C):
            gray = gray + orig[c:c + 1, :]
        gray = gray * (1.0 / C)                                  # (1, HW)

        sv = vshift(gray, -1) + 2.0 * gray + vshift(gray, 1)     # vertical  [1, 2, 1]
        ex = hshift(sv, 1) - hshift(sv, -1)                      # horizontal [-1, 0, 1]
        sh = hshift(gray, -1) + 2.0 * gray + hshift(gray, 1)     # horizontal [1, 2, 1]
        ey = vshift(sh, 1) - vshift(sh, -1)                      # vertical  [-1, 0, 1]
        edges = jnp.sqrt(ex * ex + ey * ey)

        def mean_blur(e):
            # MEAN_K == (1/25)*box5 + (1/10-1/25)*box3 + (1/5-1/10)*delta, boxes separable.
            h3 = hshift(e, -1) + e + hshift(e, 1)
            h5 = h3 + hshift(e, -2) + hshift(e, 2)
            b3 = vshift(h3, -1) + h3 + vshift(h3, 1)
            b5 = vshift(h5, -2) + vshift(h5, -1) + h5 + vshift(h5, 1) + vshift(h5, 2)
            return b5 * (1.0 / 25.0) + b3 * (3.0 / 50.0) + e * (1.0 / 10.0)

        mask = jnp.clip(mean_blur(mean_blur(edges)), 0.2, 0.95)  # (1, HW)
        inv_mask = 1.0 - mask

        # ---- edge-comparison partial sums
        num1 = jnp.sum(jnp.abs(orig - trans) * mask)
        den1 = jnp.sum(mask)                                     # den2 = B*HW - sum(den1), outside

        # ---- total-variation partial sum (all channels at once, on `transformed`)
        x = trans
        diff_i = 0.5 * ((x - hshift(x, -1)) * cm[-1] + (x - hshift(x, 1)) * cm[1])
        diff_j = 0.5 * ((x - vshift(x, 1)) * rm[1] + (x - vshift(x, -1)) * rm[-1])
        num2 = jnp.sum(jnp.abs(0.5 * (diff_i + diff_j) * inv_mask))

        # ---- pack the three partials into one tile-aligned slab (rows 0/1/2), one vst.
        sub = lax.broadcasted_iota(jnp.int32, (1, 8, 128), 1)
        out_ref[...] = jnp.where(sub == 0, num1, jnp.where(sub == 1, den1, num2))

    return kernel


def custom_loss(original, transformed, lambda_smooth=LAMBDA_SMOOTH):
    """original, transformed: (B, C, H, W). Returns scalar loss (float32)."""
    B, C, H, W = original.shape
    HW = H * W
    # Free HBM reshape: present lane-dense (C, H*W) slabs to the kernel.
    o2 = original.reshape(B, C, HW)
    t2 = transformed.reshape(B, C, HW)
    col_map = (jnp.arange(HW, dtype=jnp.int32) % W).reshape(1, HW)

    partials = pl.pallas_call(
        _make_kernel(C, H, W),
        out_shape=jax.ShapeDtypeStruct((B, 8, 128), jnp.float32),
        grid=(B,),
        in_specs=[
            pl.BlockSpec((1, HW), lambda b: (0, 0)),         # col map (same block every step)
            pl.BlockSpec((1, C, HW), lambda b: (b, 0, 0)),   # original[b]
            pl.BlockSpec((1, C, HW), lambda b: (b, 0, 0)),   # transformed[b]
        ],
        out_specs=pl.BlockSpec((1, 8, 128), lambda b: (b, 0, 0)),
        compiler_params=pltpu.CompilerParams(
            dimension_semantics=("parallel",),               # v7x: shard batches across 2 TCs
            vmem_limit_bytes=48 * 1024 * 1024,
        ),
    )(col_map, o2, t2)

    num1_t = jnp.sum(partials[:, 0, 0])
    den1_t = jnp.sum(partials[:, 1, 0])
    num2_t = jnp.sum(partials[:, 2, 0])
    den2_t = jnp.float32(B * HW) - den1_t                    # sum(1 - mask), analytically
    return num1_t / den1_t + lambda_smooth * (num2_t / den2_t)


# ---------------- pure-JAX reference (correctness check only) ----------------
def _reference_loss(original, transformed, lam=LAMBDA_SMOOTH):
    f32 = jnp.float32
    sobel_x = jnp.array(SOBEL_X, f32).reshape(1, 1, 3, 3)
    sobel_y = jnp.array(SOBEL_Y, f32).reshape(1, 1, 3, 3)
    mean_k = jnp.array(MEAN_K, f32).reshape(1, 1, 5, 5)

    def conv(x, k, p):
        return lax.conv_general_dilated(x, k, (1, 1), [(p, p), (p, p)],
                                        dimension_numbers=("NCHW", "OIHW", "NCHW"))

    gray = original.mean(axis=1, keepdims=True)
    ex = conv(gray, sobel_x, 1)
    ey = conv(gray, sobel_y, 1)
    edges = jnp.sqrt(ex ** 2 + ey ** 2)
    em = conv(conv(edges, mean_k, 2), mean_k, 2)
    mask = jnp.clip(em, 0.2, 0.95)

    diff = jnp.abs(original - transformed) * mask
    edge_loss = diff.sum() / mask.sum()

    img = transformed
    d_r = img[:, :, :, 1:] - img[:, :, :, :-1]
    d_l = img[:, :, :, :-1] - img[:, :, :, 1:]
    zW = jnp.zeros(d_r.shape[:3] + (1,), f32)
    diff_i = (jnp.concatenate([zW, d_r], 3) + jnp.concatenate([d_l, zW], 3)) / 2
    d_u = img[:, :, :-1, :] - img[:, :, 1:, :]
    d_b = img[:, :, 1:, :] - img[:, :, :-1, :]
    zH = jnp.zeros((img.shape[0], img.shape[1], 1, img.shape[3]), f32)
    diff_j = (jnp.concatenate([d_u, zH], 2) + jnp.concatenate([zH, d_b], 2)) / 2
    inv = 1.0 - mask
    dd = (diff_i + diff_j) / 2 * inv
    tv = jnp.abs(dd).sum() / inv.sum()
    return edge_loss + lam * tv


if __name__ == "__main__":
    key = jax.random.PRNGKey(0)
    k1, k2 = jax.random.split(key)
    B, C, H, W = 2, 3, 16, 16
    original = jax.random.uniform(k1, (B, C, H, W), jnp.float32)
    transformed = jax.random.uniform(k2, (B, C, H, W), jnp.float32)

    loss = custom_loss(original, transformed)
    jax.block_until_ready(loss)

    ref = _reference_loss(original, transformed)
    assert abs(float(loss) - float(ref)) <= 1e-3 * max(1.0, abs(float(ref))), (float(loss), float(ref))
    print("KERNEL_OK")
</pallas_src>

<mosaic_0001>
module attributes {stable_mosaic.version = 11 : i64} {
  func.func @kernel(%arg0: i32, %arg1: memref<1x256xi32, #tpu.memory_space<vmem>>, %arg2: memref<1x3x256xf32, #tpu.memory_space<vmem>>, %arg3: memref<1x3x256xf32, #tpu.memory_space<vmem>>, %arg4: memref<1x8x128xf32, #tpu.memory_space<vmem>>) attributes {dimension_semantics = [#tpu.dimension_semantics<parallel>], iteration_bounds = array<i64: 2>, scalar_prefetch = 0 : i64, scratch_operands = 0 : i64, tpu.core_type = #tpu.core_type<tc>, window_params = [{pipeline_mode = #tpu.pipeline_mode<synchronous>, transform_indices = @transform_0, window_bounds = array<i64: 1, 256>}, {transform_indices = @transform_1, window_bounds = array<i64: 1, 3, 256>}, {transform_indices = @transform_2, window_bounds = array<i64: 1, 3, 256>}, {transform_indices = @transform_3, window_bounds = array<i64: 1, 8, 128>}]} {
    %c0 = arith.constant 0 : index
    %c0_0 = arith.constant 0 : index
    %c0_1 = arith.constant 0 : index
    %0 = vector.load %arg2[%c0, %c0_0, %c0_1] : memref<1x3x256xf32, #tpu.memory_space<vmem>>, vector<1x3x256xf32>
    %1 = vector.shape_cast %0 : vector<1x3x256xf32> to vector<3x256xf32>
    %c0_2 = arith.constant 0 : index
    %c0_3 = arith.constant 0 : index
    %c0_4 = arith.constant 0 : index
    %2 = vector.load %arg3[%c0_2, %c0_3, %c0_4] : memref<1x3x256xf32, #tpu.memory_space<vmem>>, vector<1x3x256xf32>
    %3 = vector.shape_cast %2 : vector<1x3x256xf32> to vector<3x256xf32>
    %c0_5 = arith.constant 0 : index
    %c0_6 = arith.constant 0 : index
    %4 = vector.load %arg1[%c0_5, %c0_6] : memref<1x256xi32, #tpu.memory_space<vmem>>, vector<1x256xi32>
    %5 = tpu.iota {dimensions = array<i32: 1>} : vector<1x256xi32>
    %c-2_i32 = arith.constant -2 : i32
    %6 = vector.broadcast %c-2_i32 : i32 to vector<1x256xi32>
    %7 = arith.addi %4, %6 : vector<1x256xi32>
    %c0_i32 = arith.constant 0 : i32
    %8 = vector.broadcast %c0_i32 : i32 to vector<1x256xi32>
    %9 = arith.cmpi sge, %7, %8 : vector<1x256xi32>
    %c-2_i32_7 = arith.constant -2 : i32
    %10 = vector.broadcast %c-2_i32_7 : i32 to vector<1x256xi32>
    %11 = arith.addi %4, %10 : vector<1x256xi32>
    %c15_i32 = arith.constant 15 : i32
    %12 = vector.broadcast %c15_i32 : i32 to vector<1x256xi32>
    %13 = arith.cmpi sle, %11, %12 : vector<1x256xi32>
    %14 = arith.andi %9, %13 : vector<1x256xi1>
    %15 = arith.extui %14 : vector<1x256xi1> to vector<1x256xi32>
    %16 = arith.sitofp %15 : vector<1x256xi32> to vector<1x256xf32>
    %c-1_i32 = arith.constant -1 : i32
    %17 = vector.broadcast %c-1_i32 : i32 to vector<1x256xi32>
    %18 = arith.addi %4, %17 : vector<1x256xi32>
    %c0_i32_8 = arith.constant 0 : i32
    %19 = vector.broadcast %c0_i32_8 : i32 to vector<1x256xi32>
    %20 = arith.cmpi sge, %18, %19 : vector<1x256xi32>
    %c-1_i32_9 = arith.constant -1 : i32
    %21 = vector.broadcast %c-1_i32_9 : i32 to vector<1x256xi32>
    %22 = arith.addi %4, %21 : vector<1x256xi32>
    %c15_i32_10 = arith.constant 15 : i32
    %23 = vector.broadcast %c15_i32_10 : i32 to vector<1x256xi32>
    %24 = arith.cmpi sle, %22, %23 : vector<1x256xi32>
    %25 = arith.andi %20, %24 : vector<1x256xi1>
    %26 = arith.extui %25 : vector<1x256xi1> to vector<1x256xi32>
    %27 = arith.sitofp %26 : vector<1x256xi32> to vector<1x256xf32>
    %c1_i32 = arith.constant 1 : i32
    %28 = vector.broadcast %c1_i32 : i32 to vector<1x256xi32>
    %29 = arith.addi %4, %28 : vector<1x256xi32>
    %c0_i32_11 = arith.constant 0 : i32
    %30 = vector.broadcast %c0_i32_11 : i32 to vector<1x256xi32>
    %31 = arith.cmpi sge, %29, %30 : vector<1x256xi32>
    %c1_i32_12 = arith.constant 1 : i32
    %32 = vector.broadcast %c1_i32_12 : i32 to vector<1x256xi32>
    %33 = arith.addi %4, %32 : vector<1x256xi32>
    %c15_i32_13 = arith.constant 15 : i32
    %34 = vector.broadcast %c15_i32_13 : i32 to vector<1x256xi32>
    %35 = arith.cmpi sle, %33, %34 : vector<1x256xi32>
    %36 = arith.andi %31, %35 : vector<1x256xi1>
    %37 = arith.extui %36 : vector<1x256xi1> to vector<1x256xi32>
    %38 = arith.sitofp %37 : vector<1x256xi32> to vector<1x256xf32>
    %c2_i32 = arith.constant 2 : i32
    %39 = vector.broadcast %c2_i32 : i32 to vector<1x256xi32>
    %40 = arith.addi %4, %39 : vector<1x256xi32>
    %c0_i32_14 = arith.constant 0 : i32
    %41 = vector.broadcast %c0_i32_14 : i32 to vector<1x256xi32>
    %42 = arith.cmpi sge, %40, %41 : vector<1x256xi32>
    %c2_i32_15 = arith.constant 2 : i32
    %43 = vector.broadcast %c2_i32_15 : i32 to vector<1x256xi32>
    %44 = arith.addi %4, %43 : vector<1x256xi32>
    %c15_i32_16 = arith.constant 15 : i32
    %45 = vector.broadcast %c15_i32_16 : i32 to vector<1x256xi32>
    %46 = arith.cmpi sle, %44, %45 : vector<1x256xi32>
    %47 = arith.andi %42, %46 : vector<1x256xi1>
    %48 = arith.extui %47 : vector<1x256xi1> to vector<1x256xi32>
    %49 = arith.sitofp %48 : vector<1x256xi32> to vector<1x256xf32>
    %c-32_i32 = arith.constant -32 : i32
    %50 = vector.broadcast %c-32_i32 : i32 to vector<1x256xi32>
    %51 = arith.addi %5, %50 : vector<1x256xi32>
    %c0_i32_17 = arith.constant 0 : i32
    %52 = vector.broadcast %c0_i32_17 : i32 to vector<1x256xi32>
    %53 = arith.cmpi sge, %51, %52 : vector<1x256xi32>
    %c-32_i32_18 = arith.constant -32 : i32
    %54 = vector.broadcast %c-32_i32_18 : i32 to vector<1x256xi32>
    %55 = arith.addi %5, %54 : vector<1x256xi32>
    %c255_i32 = arith.constant 255 : i32
    %56 = vector.broadcast %c255_i32 : i32 to vector<1x256xi32>
    %57 = arith.cmpi sle, %55, %56 : vector<1x256xi32>
    %58 = arith.andi %53, %57 : vector<1x256xi1>
    %59 = arith.extui %58 : vector<1x256xi1> to vector<1x256xi32>
    %60 = arith.sitofp %59 : vector<1x256xi32> to vector<1x256xf32>
    %c-16_i32 = arith.constant -16 : i32
    %61 = vector.broadcast %c-16_i32 : i32 to vector<1x256xi32>
    %62 = arith.addi %5, %61 : vector<1x256xi32>
    %c0_i32_19 = arith.constant 0 : i32
    %63 = vector.broadcast %c0_i32_19 : i32 to vector<1x256xi32>
    %64 = arith.cmpi sge, %62, %63 : vector<1x256xi32>
    %c-16_i32_20 = arith.constant -16 : i32
    %65 = vector.broadcast %c-16_i32_20 : i32 to vector<1x256xi32>
    %66 = arith.addi %5, %65 : vector<1x256xi32>
    %c255_i32_21 = arith.constant 255 : i32
    %67 = vector.broadcast %c255_i32_21 : i32 to vector<1x256xi32>
    %68 = arith.cmpi sle, %66, %67 : vector<1x256xi32>
    %69 = arith.andi %64, %68 : vector<1x256xi1>
    %70 = arith.extui %69 : vector<1x256xi1> to vector<1x256xi32>
    %71 = arith.sitofp %70 : vector<1x256xi32> to vector<1x256xf32>
    %c16_i32 = arith.constant 16 : i32
    %72 = vector.broadcast %c16_i32 : i32 to vector<1x256xi32>
    %73 = arith.addi %5, %72 : vector<1x256xi32>
    %c0_i32_22 = arith.constant 0 : i32
    %74 = vector.broadcast %c0_i32_22 : i32 to vector<1x256xi32>
    %75 = arith.cmpi sge, %73, %74 : vector<1x256xi32>
    %c16_i32_23 = arith.constant 16 : i32
    %76 = vector.broadcast %c16_i32_23 : i32 to vector<1x256xi32>
    %77 = arith.addi %5, %76 : vector<1x256xi32>
    %c255_i32_24 = arith.constant 255 : i32
    %78 = vector.broadcast %c255_i32_24 : i32 to vector<1x256xi32>
    %79 = arith.cmpi sle, %77, %78 : vector<1x256xi32>
    %80 = arith.andi %75, %79 : vector<1x256xi1>
    %81 = arith.extui %80 : vector<1x256xi1> to vector<1x256xi32>
    %82 = arith.sitofp %81 : vector<1x256xi32> to vector<1x256xf32>
    %c32_i32 = arith.constant 32 : i32
    %83 = vector.broadcast %c32_i32 : i32 to vector<1x256xi32>
    %84 = arith.addi %5, %83 : vector<1x256xi32>
    %c0_i32_25 = arith.constant 0 : i32
    %85 = vector.broadcast %c0_i32_25 : i32 to vector<1x256xi32>
    %86 = arith.cmpi sge, %84, %85 : vector<1x256xi32>
    %c32_i32_26 = arith.constant 32 : i32
    %87 = vector.broadcast %c32_i32_26 : i32 to vector<1x256xi32>
    %88 = arith.addi %5, %87 : vector<1x256xi32>
    %c255_i32_27 = arith.constant 255 : i32
    %89 = vector.broadcast %c255_i32_27 : i32 to vector<1x256xi32>
    %90 = arith.cmpi sle, %88, %89 : vector<1x256xi32>
    %91 = arith.andi %86, %90 : vector<1x256xi1>
    %92 = arith.extui %91 : vector<1x256xi1> to vector<1x256xi32>
    %93 = arith.sitofp %92 : vector<1x256xi32> to vector<1x256xf32>
    %94 = vector.extract_strided_slice %1 {offsets = [0, 0], sizes = [1, 256], strides = [1, 1]} : vector<3x256xf32> to vector<1x256xf32>
    %95 = vector.extract_strided_slice %1 {offsets = [1, 0], sizes = [1, 256], strides = [1, 1]} : vector<3x256xf32> to vector<1x256xf32>
    %96 = arith.addf %94, %95 : vector<1x256xf32>
    %97 = vector.extract_strided_slice %1 {offsets = [2, 0], sizes = [1, 256], strides = [1, 1]} : vector<3x256xf32> to vector<1x256xf32>
    %98 = arith.addf %96, %97 : vector<1x256xf32>
    %cst = arith.constant 0.333333343 : f32
    %99 = vector.broadcast %cst : f32 to vector<1x256xf32>
    %100 = arith.mulf %98, %99 : vector<1x256xf32>
    %c16_i32_28 = arith.constant 16 : i32
    %101 = tpu.dynamic_rotate %100 by %c16_i32_28 dim 1 : vector<1x256xf32>, i32 -> vector<1x256xf32>
    %102 = arith.mulf %101, %71 : vector<1x256xf32>
    %cst_29 = arith.constant 2.000000e+00 : f32
    %103 = vector.broadcast %cst_29 : f32 to vector<1x256xf32>
    %104 = arith.mulf %103, %100 : vector<1x256xf32>
    %105 = arith.addf %102, %104 : vector<1x256xf32>
    %c240_i32 = arith.constant 240 : i32
    %106 = tpu.dynamic_rotate %100 by %c240_i32 dim 1 : vector<1x256xf32>, i32 -> vector<1x256xf32>
    %107 = arith.mulf %106, %82 : vector<1x256xf32>
    %108 = arith.addf %105, %107 : vector<1x256xf32>
    %c255_i32_30 = arith.constant 255 : i32
    %109 = tpu.dynamic_rotate %108 by %c255_i32_30 dim 1 : vector<1x256xf32>, i32 -> vector<1x256xf32>
    %110 = arith.mulf %109, %38 : vector<1x256xf32>
    %c1_i32_31 = arith.constant 1 : i32
    %111 = tpu.dynamic_rotate %108 by %c1_i32_31 dim 1 : vector<1x256xf32>, i32 -> vector<1x256xf32>
    %112 = arith.mulf %111, %27 : vector<1x256xf32>
    %113 = arith.subf %110, %112 : vector<1x256xf32>
    %c1_i32_32 = arith.constant 1 : i32
    %114 = tpu.dynamic_rotate %100 by %c1_i32_32 dim 1 : vector<1x256xf32>, i32 -> vector<1x256xf32>
    %115 = arith.mulf %114, %27 : vector<1x256xf32>
    %cst_33 = arith.constant 2.000000e+00 : f32
    %116 = vector.broadcast %cst_33 : f32 to vector<1x256xf32>
    %117 = arith.mulf %116, %100 : vector<1x256xf32>
    %118 = arith.addf %115, %117 : vector<1x256xf32>
    %c255_i32_34 = arith.constant 255 : i32
    %119 = tpu.dynamic_rotate %100 by %c255_i32_34 dim 1 : vector<1x256xf32>, i32 -> vector<1x256xf32>
    %120 = arith.mulf %119, %38 : vector<1x256xf32>
    %121 = arith.addf %118, %120 : vector<1x256xf32>
    %c240_i32_35 = arith.constant 240 : i32
    %122 = tpu.dynamic_rotate %121 by %c240_i32_35 dim 1 : vector<1x256xf32>, i32 -> vector<1x256xf32>
    %123 = arith.mulf %122, %82 : vector<1x256xf32>
    %c16_i32_36 = arith.constant 16 : i32
    %124 = tpu.dynamic_rotate %121 by %c16_i32_36 dim 1 : vector<1x256xf32>, i32 -> vector<1x256xf32>
    %125 = arith.mulf %124, %71 : vector<1x256xf32>
    %126 = arith.subf %123, %125 : vector<1x256xf32>
    %127 = arith.mulf %113, %113 : vector<1x256xf32>
    %128 = arith.mulf %126, %126 : vector<1x256xf32>
    %129 = arith.addf %127, %128 : vector<1x256xf32>
    %130 = math.sqrt %129 : vector<1x256xf32>
    %c1_i32_37 = arith.constant 1 : i32
    %131 = tpu.dynamic_rotate %130 by %c1_i32_37 dim 1 : vector<1x256xf32>, i32 -> vector<1x256xf32>
    %132 = arith.mulf %131, %27 : vector<1x256xf32>
    %133 = arith.addf %132, %130 : vector<1x256xf32>
    %c255_i32_38 = arith.constant 255 : i32
    %134 = tpu.dynamic_rotate %130 by %c255_i32_38 dim 1 : vector<1x256xf32>, i32 -> vector<1x256xf32>
    %135 = arith.mulf %134, %38 : vector<1x256xf32>
    %136 = arith.addf %133, %135 : vector<1x256xf32>
    %c2_i32_39 = arith.constant 2 : i32
    %137 = tpu.dynamic_rotate %130 by %c2_i32_39 dim 1 : vector<1x256xf32>, i32 -> vector<1x256xf32>
    %138 = arith.mulf %137, %16 : vector<1x256xf32>
    %139 = arith.addf %136, %138 : vector<1x256xf32>
    %c254_i32 = arith.constant 254 : i32
    %140 = tpu.dynamic_rotate %130 by %c254_i32 dim 1 : vector<1x256xf32>, i32 -> vector<1x256xf32>
    %141 = arith.mulf %140, %49 : vector<1x256xf32>
    %142 = arith.addf %139, %141 : vector<1x256xf32>
    %c16_i32_40 = arith.constant 16 : i32
    %143 = tpu.dynamic_rotate %136 by %c16_i32_40 dim 1 : vector<1x256xf32>, i32 -> vector<1x256xf32>
    %144 = arith.mulf %143, %71 : vector<1x256xf32>
    %145 = arith.addf %144, %136 : vector<1x256xf32>
    %c240_i32_41 = arith.constant 240 : i32
    %146 = tpu.dynamic_rotate %136 by %c240_i32_41 dim 1 : vector<1x256xf32>, i32 -> vector<1x256xf32>
    %147 = arith.mulf %146, %82 : vector<1x256xf32>
    %148 = arith.addf %145, %147 : vector<1x256xf32>
    %c32_i32_42 = arith.constant 32 : i32
    %149 = tpu.dynamic_rotate %142 by %c32_i32_42 dim 1 : vector<1x256xf32>, i32 -> vector<1x256xf32>
    %150 = arith.mulf %149, %60 : vector<1x256xf32>
    %c16_i32_43 = arith.constant 16 : i32
    %151 = tpu.dynamic_rotate %142 by %c16_i32_43 dim 1 : vector<1x256xf32>, i32 -> vector<1x256xf32>
    %152 = arith.mulf %151, %71 : vector<1x256xf32>
    %153 = arith.addf %150, %152 : vector<1x256xf32>
    %154 = arith.addf %153, %142 : vector<1x256xf32>
    %c240_i32_44 = arith.constant 240 : i32
    %155 = tpu.dynamic_rotate %142 by %c240_i32_44 dim 1 : vector<1x256xf32>, i32 -> vector<1x256xf32>
    %156 = arith.mulf %155, %82 : vector<1x256xf32>
    %157 = arith.addf %154, %156 : vector<1x256xf32>
    %c224_i32 = arith.constant 224 : i32
    %158 = tpu.dynamic_rotate %142 by %c224_i32 dim 1 : vector<1x256xf32>, i32 -> vector<1x256xf32>
    %159 = arith.mulf %158, %93 : vector<1x256xf32>
    %160 = arith.addf %157, %159 : vector<1x256xf32>
    %cst_45 = arith.constant 4.000000e-02 : f32
    %161 = vector.broadcast %cst_45 : f32 to vector<1x256xf32>
    %162 = arith.mulf %160, %161 : vector<1x256xf32>
    %cst_46 = arith.constant 6.000000e-02 : f32
    %163 = vector.broadcast %cst_46 : f32 to vector<1x256xf32>
    %164 = arith.mulf %148, %163 : vector<1x256xf32>
    %165 = arith.addf %162, %164 : vector<1x256xf32>
    %cst_47 = arith.constant 1.000000e-01 : f32
    %166 = vector.broadcast %cst_47 : f32 to vector<1x256xf32>
    %167 = arith.mulf %130, %166 : vector<1x256xf32>
    %168 = arith.addf %165, %167 : vector<1x256xf32>
    %c1_i32_48 = arith.constant 1 : i32
    %169 = tpu.dynamic_rotate %168 by %c1_i32_48 dim 1 : vector<1x256xf32>, i32 -> vector<1x256xf32>
    %170 = arith.mulf %169, %27 : vector<1x256xf32>
    %171 = arith.addf %170, %168 : vector<1x256xf32>
    %c255_i32_49 = arith.constant 255 : i32
    %172 = tpu.dynamic_rotate %168 by %c255_i32_49 dim 1 : vector<1x256xf32>, i32 -> vector<1x256xf32>
    %173 = arith.mulf %172, %38 : vector<1x256xf32>
    %174 = arith.addf %171, %173 : vector<1x256xf32>
    %c2_i32_50 = arith.constant 2 : i32
    %175 = tpu.dynamic_rotate %168 by %c2_i32_50 dim 1 : vector<1x256xf32>, i32 -> vector<1x256xf32>
    %176 = arith.mulf %175, %16 : vector<1x256xf32>
    %177 = arith.addf %174, %176 : vector<1x256xf32>
    %c254_i32_51 = arith.constant 254 : i32
    %178 = tpu.dynamic_rotate %168 by %c254_i32_51 dim 1 : vector<1x256xf32>, i32 -> vector<1x256xf32>
    %179 = arith.mulf %178, %49 : vector<1x256xf32>
    %180 = arith.addf %177, %179 : vector<1x256xf32>
    %c16_i32_52 = arith.constant 16 : i32
    %181 = tpu.dynamic_rotate %174 by %c16_i32_52 dim 1 : vector<1x256xf32>, i32 -> vector<1x256xf32>
    %182 = arith.mulf %181, %71 : vector<1x256xf32>
    %183 = arith.addf %182, %174 : vector<1x256xf32>
    %c240_i32_53 = arith.constant 240 : i32
    %184 = tpu.dynamic_rotate %174 by %c240_i32_53 dim 1 : vector<1x256xf32>, i32 -> vector<1x256xf32>
    %185 = arith.mulf %184, %82 : vector<1x256xf32>
    %186 = arith.addf %183, %185 : vector<1x256xf32>
    %c32_i32_54 = arith.constant 32 : i32
    %187 = tpu.dynamic_rotate %180 by %c32_i32_54 dim 1 : vector<1x256xf32>, i32 -> vector<1x256xf32>
    %188 = arith.mulf %187, %60 : vector<1x256xf32>
    %c16_i32_55 = arith.constant 16 : i32
    %189 = tpu.dynamic_rotate %180 by %c16_i32_55 dim 1 : vector<1x256xf32>, i32 -> vector<1x256xf32>
    %190 = arith.mulf %189, %71 : vector<1x256xf32>
    %191 = arith.addf %188, %190 : vector<1x256xf32>
    %192 = arith.addf %191, %180 : vector<1x256xf32>
    %c240_i32_56 = arith.constant 240 : i32
    %193 = tpu.dynamic_rotate %180 by %c240_i32_56 dim 1 : vector<1x256xf32>, i32 -> vector<1x256xf32>
    %194 = arith.mulf %193, %82 : vector<1x256xf32>
    %195 = arith.addf %192, %194 : vector<1x256xf32>
    %c224_i32_57 = arith.constant 224 : i32
    %196 = tpu.dynamic_rotate %180 by %c224_i32_57 dim 1 : vector<1x256xf32>, i32 -> vector<1x256xf32>
    %197 = arith.mulf %196, %93 : vector<1x256xf32>
    %198 = arith.addf %195, %197 : vector<1x256xf32>
    %cst_58 = arith.constant 4.000000e-02 : f32
    %199 = vector.broadcast %cst_58 : f32 to vector<1x256xf32>
    %200 = arith.mulf %198, %199 : vector<1x256xf32>
    %cst_59 = arith.constant 6.000000e-02 : f32
    %201 = vector.broadcast %cst_59 : f32 to vector<1x256xf32>
    %202 = arith.mulf %186, %201 : vector<1x256xf32>
    %203 = arith.addf %200, %202 : vector<1x256xf32>
    %cst_60 = arith.constant 1.000000e-01 : f32
    %204 = vector.broadcast %cst_60 : f32 to vector<1x256xf32>
    %205 = arith.mulf %168, %204 : vector<1x256xf32>
    %206 = arith.addf %203, %205 : vector<1x256xf32>
    %cst_61 = arith.constant 2.000000e-01 : f32
    %cst_62 = arith.constant 0.949999988 : f32
    %207 = vector.broadcast %cst_61 : f32 to vector<1x256xf32>
    %208 = arith.maximumf %207, %206 : vector<1x256xf32>
    %209 = vector.broadcast %cst_62 : f32 to vector<1x256xf32>
    %210 = arith.minimumf %209, %208 : vector<1x256xf32>
    %cst_63 = arith.constant 1.000000e+00 : f32
    %211 = vector.broadcast %cst_63 : f32 to vector<1x256xf32>
    %212 = arith.subf %211, %210 : vector<1x256xf32>
    %213 = arith.subf %1, %3 : vector<3x256xf32>
    %214 = math.absf %213 : vector<3x256xf32>
    %215 = vector.broadcast %210 : vector<1x256xf32> to vector<3x256xf32>
    %216 = arith.mulf %214, %215 : vector<3x256xf32>
    %217 = vector.shape_cast %216 : vector<3x256xf32> to vector<1x3x256xf32>
    %cst_64 = arith.constant dense<0.000000e+00> : vector<1xf32>
    %218 = vector.multi_reduction <add>, %217, %cst_64 [1, 2] : vector<1x3x256xf32> to vector<1xf32>
    %219 = vector.shape_cast %218 : vector<1xf32> to vector<1x1x1xf32>
    %220 = vector.extract %219[0, 0, 0] : f32 from vector<1x1x1xf32>
    %221 = vector.shape_cast %210 : vector<1x256xf32> to vector<1x1x256xf32>
    %cst_65 = arith.constant dense<0.000000e+00> : vector<1xf32>
    %222 = vector.multi_reduction <add>, %221, %cst_65 [1, 2] : vector<1x1x256xf32> to vector<1xf32>
    %223 = vector.shape_cast %222 : vector<1xf32> to vector<1x1x1xf32>
    %224 = vector.extract %223[0, 0, 0] : f32 from vector<1x1x1xf32>
    %c1_i32_66 = arith.constant 1 : i32
    %225 = tpu.dynamic_rotate %3 by %c1_i32_66 dim 1 : vector<3x256xf32>, i32 -> vector<3x256xf32>
    %226 = vector.broadcast %27 : vector<1x256xf32> to vector<3x256xf32>
    %227 = arith.mulf %225, %226 : vector<3x256xf32>
    %228 = arith.subf %3, %227 : vector<3x256xf32>
    %229 = vector.broadcast %27 : vector<1x256xf32> to vector<3x256xf32>
    %230 = arith.mulf %228, %229 : vector<3x256xf32>
    %c255_i32_67 = arith.constant 255 : i32
    %231 = tpu.dynamic_rotate %3 by %c255_i32_67 dim 1 : vector<3x256xf32>, i32 -> vector<3x256xf32>
    %232 = vector.broadcast %38 : vector<1x256xf32> to vector<3x256xf32>
    %233 = arith.mulf %231, %232 : vector<3x256xf32>
    %234 = arith.subf %3, %233 : vector<3x256xf32>
    %235 = vector.broadcast %38 : vector<1x256xf32> to vector<3x256xf32>
    %236 = arith.mulf %234, %235 : vector<3x256xf32>
    %237 = arith.addf %230, %236 : vector<3x256xf32>
    %cst_68 = arith.constant 5.000000e-01 : f32
    %238 = vector.broadcast %cst_68 : f32 to vector<3x256xf32>
    %239 = arith.mulf %238, %237 : vector<3x256xf32>
    %c240_i32_69 = arith.constant 240 : i32
    %240 = tpu.dynamic_rotate %3 by %c240_i32_69 dim 1 : vector<3x256xf32>, i32 -> vector<3x256xf32>
    %241 = vector.broadcast %82 : vector<1x256xf32> to vector<3x256xf32>
    %242 = arith.mulf %240, %241 : vector<3x256xf32>
    %243 = arith.subf %3, %242 : vector<3x256xf32>
    %244 = vector.broadcast %82 : vector<1x256xf32> to vector<3x256xf32>
    %245 = arith.mulf %243, %244 : vector<3x256xf32>
    %c16_i32_70 = arith.constant 16 : i32
    %246 = tpu.dynamic_rotate %3 by %c16_i32_70 dim 1 : vector<3x256xf32>, i32 -> vector<3x256xf32>
    %247 = vector.broadcast %71 : vector<1x256xf32> to vector<3x256xf32>
    %248 = arith.mulf %246, %247 : vector<3x256xf32>
    %249 = arith.subf %3, %248 : vector<3x256xf32>
    %250 = vector.broadcast %71 : vector<1x256xf32> to vector<3x256xf32>
    %251 = arith.mulf %249, %250 : vector<3x256xf32>
    %252 = arith.addf %245, %251 : vector<3x256xf32>
    %cst_71 = arith.constant 5.000000e-01 : f32
    %253 = vector.broadcast %cst_71 : f32 to vector<3x256xf32>
    %254 = arith.mulf %253, %252 : vector<3x256xf32>
    %255 = arith.addf %239, %254 : vector<3x256xf32>
    %cst_72 = arith.constant 5.000000e-01 : f32
    %256 = vector.broadcast %cst_72 : f32 to vector<3x256xf32>
    %257 = arith.mulf %256, %255 : vector<3x256xf32>
    %258 = vector.broadcast %212 : vector<1x256xf32> to vector<3x256xf32>
    %259 = arith.mulf %257, %258 : vector<3x256xf32>
    %260 = math.absf %259 : vector<3x256xf32>
    %261 = vector.shape_cast %260 : vector<3x256xf32> to vector<1x3x256xf32>
    %cst_73 = arith.constant dense<0.000000e+00> : vector<1xf32>
    %262 = vector.multi_reduction <add>, %261, %cst_73 [1, 2] : vector<1x3x256xf32> to vector<1xf32>
    %263 = vector.shape_cast %262 : vector<1xf32> to vector<1x1x1xf32>
    %264 = vector.extract %263[0, 0, 0] : f32 from vector<1x1x1xf32>
    %265 = tpu.iota {dimensions = array<i32: 1>} : vector<1x8x128xi32>
    %c0_i32_74 = arith.constant 0 : i32
    %266 = vector.broadcast %c0_i32_74 : i32 to vector<1x8x128xi32>
    %267 = arith.cmpi eq, %265, %266 : vector<1x8x128xi32>
    %c1_i32_75 = arith.constant 1 : i32
    %268 = vector.broadcast %c1_i32_75 : i32 to vector<1x8x128xi32>
    %269 = arith.cmpi eq, %265, %268 : vector<1x8x128xi32>
    %270 = vector.broadcast %224 : f32 to vector<1x8x128xf32>
    %271 = vector.broadcast %264 : f32 to vector<1x8x128xf32>
    %272 = arith.select %269, %270, %271 : vector<1x8x128xi1>, vector<1x8x128xf32>
    %273 = vector.broadcast %220 : f32 to vector<1x8x128xf32>
    %274 = arith.select %267, %273, %272 : vector<1x8x128xi1>, vector<1x8x128xf32>
    %c0_76 = arith.constant 0 : index
    %c0_77 = arith.constant 0 : index
    %c0_78 = arith.constant 0 : index
    %275 = vector.load %arg4[%c0_76, %c0_77, %c0_78] : memref<1x8x128xf32, #tpu.memory_space<vmem>>, vector<1x8x128xf32>
    tpu.vector_store %arg4[%c0_76, %c0_77, %c0_78], %274 {strides = array<i32>} : memref<1x8x128xf32, #tpu.memory_space<vmem>>, vector<1x8x128xf32>,
    return
  }
  func.func @transform_0(%arg0: i32) -> (i32, i32) {
    %c0_i32 = arith.constant 0 : i32
    %c0_i32_0 = arith.constant 0 : i32
    %c0_i32_1 = arith.constant 0 : i32
    return %c0_i32, %c0_i32_0 : i32, i32
  }
  func.func @transform_1(%arg0: i32) -> (i32, i32, i32) {
    %c0_i32 = arith.constant 0 : i32
    %c0_i32_0 = arith.constant 0 : i32
    %c0_i32_1 = arith.constant 0 : i32
    return %arg0, %c0_i32, %c0_i32_0 : i32, i32, i32
  }
  func.func @transform_2(%arg0: i32) -> (i32, i32, i32) {
    %c0_i32 = arith.constant 0 : i32
    %c0_i32_0 = arith.constant 0 : i32
    %c0_i32_1 = arith.constant 0 : i32
    return %arg0, %c0_i32, %c0_i32_0 : i32, i32, i32
  }
  func.func @transform_3(%arg0: i32) -> (i32, i32, i32) {
    %c0_i32 = arith.constant 0 : i32
    %c0_i32_0 = arith.constant 0 : i32
    %c0_i32_1 = arith.constant 0 : i32
    return %arg0, %c0_i32, %c0_i32_0 : i32, i32, i32
  }
}

</mosaic_0001>

<llo_original>
// kernel: tpu_custom_call.1
$region0: #{tpu_custom_call.1}
  #allocation0 [shape = 'u32[]', space=smem, size = 0x4, offset = 0x4, fixed_abs, tag = 'smem constant byte address 0x4 - core index']
  #allocation1 [shape = 'u32[144,128]{1,0:T(1,128)}', space=vmem, size = 0x12000, scoped, tag = 'internal scratch']
  %s0 = inlined_call_operand.vmem [shape: s32[1,256], index: 0, kind: input, shape index: {}]
  %s1 = inlined_call_operand.vmem [shape: f32[2,3,256], index: 1, kind: input, shape index: {}]
  %s2 = inlined_call_operand.vmem [shape: f32[2,3,256], index: 2, kind: input, shape index: {}]
  %s3 = inlined_call_operand.hbm [shape: f32[2,8,128], index: 3, kind: output, shape index: {}]
  %s4 = sld [smem:[#allocation0]]
  $region45: #{tpu_custom_call.1} parent=0
    _
  %s6 = ssub.s32 1, %s4
  %s7 = scalar_select 0, %s6, %s4
  $region1: #{tpu_custom_call.1} parent=0
    #allocation2 [shape = 'u8[8192]{0}', space=vmem, size = 0x2000, scoped, tag = 'output window, operand 0']
    #allocation3 [shape = 's32[2]{0}', space=sflag, size = 0x8, scoped, tag = 'scoped memory for tpu_custom_call.1']
    %8 = vsyncpa [#allocation3], 0
    %s9 = scalar_lea.sflag [#allocation3], 1
    %10 = vsyncpa %s9, 0
    loop: start=0, step=1, limit=4
    $region2: #{tpu_custom_call.1} parent=1 // loop_pre_header
      _
    $region3: #{tpu_custom_call.1} parent=1 // loop_header
      %s12 = sphi 0, %s16
      %p13 = scmp.ge.s32.totalorder %s12, 4
      %s20 = sphi 0, %s20
      %s22 = sphi 0, %s20
      %s23 = sphi 0, %s22
      %s37 = sphi 0, %s23
      %s43 = sphi 0, %s45
      %s46 = sphi 0, %s43
      %s47 = sphi 0, %s46
      %s63 = sphi 0, %s47
      %s69 = sphi 0, %s71
      %s72 = sphi 0, %s69
      %s73 = sphi 0, %s72
      %s89 = sphi 0, %s73
      %s95 = sphi 0, %s97
      %s98 = sphi 0, %s95
      %s99 = sphi 0, %s98
      %s115 = sphi 0, %s99
    $region4: #{tpu_custom_call.1} parent=1 // loop_header_branch
      %15 = sbr.rel (%p13) target = $region8
    $region5: #{tpu_custom_call.1} parent=1 // loop_body
      %s17 = ssub.s32 %s12, 1
      %s18 = ssub.s32 %s12, 2
      %s19 = sadd.s32 %s12, 1
      %s21 = sadd.s32 %s20, 1
      %p24 = scmp.eq.s32.totalorder %s12, 1
      %p25 = scmp.ne.s32.totalorder %s20, %s22
      %p26 = scmp.eq.s32.totalorder %s12, 0
      %p27 = por %p25, %p26
      %p28 = scmp.ne.s32.totalorder %s20, %s22
      %p29 = scmp.eq.s32.totalorder %s17, 1
      %p30 = por %p28, %p29
      %p31 = scmp.ne.s32.totalorder %s22, %s23
      %p32 = scmp.eq.s32.totalorder %s17, 0
      %p33 = por %p31, %p32
      %p34 = scmp.ne.s32.totalorder %s22, %s23
      %p35 = scmp.eq.s32.totalorder %s18, 1
      %p36 = por %p34, %p35
      %p38 = scmp.ne.s32.totalorder %s23, %s37
      %p39 = scmp.eq.s32.totalorder %s18, 0
      %p40 = por %p38, %p39
      %s41 = ssub.s32 %s12, %s19
      %p42 = scmp.eq.s32.totalorder %s41, 0
      %s44 = sadd.s32 %s43, 1
      %s45 = scalar_select %p42, %s43, %s44
      %p48 = pneg %p42
      %p49 = scmp.eq.s32.totalorder %s12, 1
      %p50 = por %p48, %p49
      %p51 = scmp.ne.s32.totalorder %s43, %s46
      %p52 = scmp.eq.s32.totalorder %s12, 0
      %p53 = por %p51, %p52
      %p54 = scmp.ne.s32.totalorder %s43, %s46
      %p55 = scmp.eq.s32.totalorder %s17, 1
      %p56 = por %p54, %p55
      %p57 = scmp.ne.s32.totalorder %s46, %s47
      %p58 = scmp.eq.s32.totalorder %s17, 0
      %p59 = por %p57, %p58
      %p60 = scmp.ne.s32.totalorder %s46, %s47
      %p61 = scmp.eq.s32.totalorder %s18, 1
      %p62 = por %p60, %p61
      %p64 = scmp.ne.s32.totalorder %s47, %s63
      %p65 = scmp.eq.s32.totalorder %s18, 0
      %p66 = por %p64, %p65
      %s67 = ssub.s32 %s12, %s19
      %p68 = scmp.eq.s32.totalorder %s67, 0
      %s70 = sadd.s32 %s69, 1
      %s71 = scalar_select %p68, %s69, %s70
      %p74 = pneg %p68
      %p75 = scmp.eq.s32.totalorder %s12, 1
      %p76 = por %p74, %p75
      %p77 = scmp.ne.s32.totalorder %s69, %s72
      %p78 = scmp.eq.s32.totalorder %s12, 0
      %p79 = por %p77, %p78
      %p80 = scmp.ne.s32.totalorder %s69, %s72
      %p81 = scmp.eq.s32.totalorder %s17, 1
      %p82 = por %p80, %p81
      %p83 = scmp.ne.s32.totalorder %s72, %s73
      %p84 = scmp.eq.s32.totalorder %s17, 0
      %p85 = por %p83, %p84
      %p86 = scmp.ne.s32.totalorder %s72, %s73
      %p87 = scmp.eq.s32.totalorder %s18, 1
      %p88 = por %p86, %p87
      %p90 = scmp.ne.s32.totalorder %s73, %s89
      %p91 = scmp.eq.s32.totalorder %s18, 0
      %p92 = por %p90, %p91
      %s93 = ssub.s32 %s12, %s19
      %p94 = scmp.eq.s32.totalorder %s93, 0
      %s96 = sadd.s32 %s95, 1
      %s97 = scalar_select %p94, %s95, %s96
      %p100 = pneg %p94
      %p101 = scmp.eq.s32.totalorder %s12, 1
      %p102 = por %p100, %p101
      %p103 = scmp.ne.s32.totalorder %s95, %s98
      %p104 = scmp.eq.s32.totalorder %s12, 0
      %p105 = por %p103, %p104
      %p106 = scmp.ne.s32.totalorder %s95, %s98
      %p107 = scmp.eq.s32.totalorder %s17, 1
      %p108 = por %p106, %p107
      %p109 = scmp.ne.s32.totalorder %s98, %s99
      %p110 = scmp.eq.s32.totalorder %s17, 0
      %p111 = por %p109, %p110
      %p112 = scmp.ne.s32.totalorder %s98, %s99
      %p113 = scmp.eq.s32.totalorder %s18, 1
      %p114 = por %p112, %p113
      %p116 = scmp.ne.s32.totalorder %s99, %s115
      %p117 = scmp.eq.s32.totalorder %s18, 0
      %p118 = por %p116, %p117
      %p119 = scmp.le.s32.totalorder 1, %s12
      %p120 = scmp.lt.s32.totalorder %s12, 3
      %p121 = pnand %p119, %p120
      %p122 = pneg %p121
      // Predicated region
      $region9: #{tpu_custom_call.1} parent=5 // pred_check
        _
      $region10: #{tpu_custom_call.1} parent=5 // pred_check_branch
        %124 = sbr.rel (%p121) target = $region12
      $region11: #{tpu_custom_call.1} parent=5 // pred_region
        %s125 = ssub.s32 %s12, 1
        // Predicated region
        $region13: #{tpu_custom_call.1} parent=11 // pred_check
          %p126 = pneg %p33
        $region14: #{tpu_custom_call.1} parent=11 // pred_check_branch
          %128 = sbr.rel (%p126) target = $region16
        $region15: #{tpu_custom_call.1} parent=11 // pred_region
          _
        $region16: #{tpu_custom_call.1} parent=11 // pred_fallthru
          _
      $region12: #{tpu_custom_call.1} parent=5 // pred_fallthru
        _
      %p129 = scmp.lt.s32.totalorder %s12, 2
      // Predicated region
      $region17: #{tpu_custom_call.1} parent=5 // pred_check
        %p130 = pneg %p129
      $region18: #{tpu_custom_call.1} parent=5 // pred_check_branch
        %132 = sbr.rel (%p130) target = $region20
      $region19: #{tpu_custom_call.1} parent=5 // pred_region
        // Predicated region
        $region21: #{tpu_custom_call.1} parent=19 // pred_check
          %p133 = pneg %p53
        $region22: #{tpu_custom_call.1} parent=19 // pred_check_branch
          %135 = sbr.rel (%p133) target = $region24
        $region23: #{tpu_custom_call.1} parent=19 // pred_region
          %p136 = scmp.lt.s32.totalorder %s12, 1
          %s137 = scalar_select %p136, %s12, 1
          %s138 = smul.addr %s137, 2
          %s139 = smul.addr %s138, 4
          %s140 = scalar_lea.vmem %s1, %s139
        $region24: #{tpu_custom_call.1} parent=19 // pred_fallthru
          _
        // Predicated region
        $region25: #{tpu_custom_call.1} parent=19 // pred_check
          %p141 = pneg %p79
        $region26: #{tpu_custom_call.1} parent=19 // pred_check_branch
          %143 = sbr.rel (%p141) target = $region28
        $region27: #{tpu_custom_call.1} parent=19 // pred_region
          %p144 = scmp.lt.s32.totalorder %s12, 1
          %s145 = scalar_select %p144, %s12, 1
          %s146 = smul.addr %s145, 2
          %s147 = smul.addr %s146, 4
          %s148 = scalar_lea.vmem %s2, %s147
        $region28: #{tpu_custom_call.1} parent=19 // pred_fallthru
          _
      $region20: #{tpu_custom_call.1} parent=5 // pred_fallthru
        _
      %p149 = scmp.le.s32.totalorder 1, %s12
      %p150 = scmp.lt.s32.totalorder %s12, 3
      %p151 = pnand %p149, %p150
      %p152 = pneg %p151
      // Predicated region
      $region29: #{tpu_custom_call.1} parent=5 // pred_check
        _
      $region30: #{tpu_custom_call.1} parent=5 // pred_check_branch
        %154 = sbr.rel (%p151) target = $region32
      $region31: #{tpu_custom_call.1} parent=5 // pred_region
        %s155 = ssub.s32 %s12, 1
        %p156 = pneg %p33
        %p157 = pneg %p30
        %p158 = scmp.lt.s32.totalorder %s17, 1
        %s159 = scalar_select %p158, %s17, 1
        %s160 = smul.addr %s159, 2
        %s161 = smul.addr %s160, 4
        %s162 = scalar_lea.vmem %s1, %s161
        %p163 = pneg %p59
        %p164 = pneg %p56
        %p165 = scmp.lt.s32.totalorder %s17, 1
        %s166 = scalar_select %p165, %s17, 1
        %s167 = smul.addr %s166, 2
        %s168 = smul.addr %s167, 4
        %s169 = scalar_lea.vmem %s2, %s168
        %p170 = pneg %p85
        %p171 = pneg %p82
        %p172 = pneg %p111
        %p173 = pneg %p108
        %s174 = sand.u32 %s98, 1
        %s175 = scalar_lea.sflag [#allocation3], %s174
        %s176 = sand.u32 %s98, 1
        %s177 = smul.addr %s176, 8
        %s178 = scalar_lea.vmem [#allocation2], %s177
        %p179 = scmp.lt.s32.totalorder %s17, 1
        %s180 = scalar_select %p179, %s17, 1
        %s181 = smul.addr %s180, 2
        %s182 = smul.addr %s181, 4
        %s183 = scalar_lea.vmem %s1, %s182
        %p184 = scmp.lt.s32.totalorder %s17, 1
        %s185 = scalar_select %p184, %s17, 1
        %s186 = smul.addr %s185, 2
        %s187 = smul.addr %s186, 4
        %s188 = scalar_lea.vmem %s2, %s187
        %v189 = vld [vmem:[%s183] sm:$0x77]
        %v190 = vld [vmem:[%s188] sm:$0x77]
        %v191 = vld [vmem:[%s0] sm:$0x3]
        %v192 = vlaneseq
        %v193 = vand.u32 %v192, 127
        %v194 = vadd.s32 %v193, 128
        %v195 = vadd.s32 %v191, 4294967294
        %vm196 = vcmp.ge.s32.totalorder %v195, 0
        %vm197 = vcmp.le.s32.totalorder %v195, 15
        %vm198 = vmand %vm196, %vm197
        %v199 = vsel %vm198, 1, 0
        %v200 = vcvt.s32.f32 %v199
        %v201 = vadd.s32 %v191, 4294967295
        %vm202 = vcmp.ge.s32.totalorder %v201, 0
        %vm203 = vcmp.le.s32.totalorder %v201, 15
        %vm204 = vmand %vm202, %vm203
        %v205 = vsel %vm204, 1, 0
        %v206 = vcvt.s32.f32 %v205
        %v207 = vadd.s32 %v191, 1
        %vm208 = vcmp.ge.s32.totalorder %v207, 0
        %vm209 = vcmp.le.s32.totalorder %v207, 15
        %vm210 = vmand %vm208, %vm209
        %v211 = vsel %vm210, 1, 0
        %v212 = vcvt.s32.f32 %v211
        %v213 = vadd.s32 %v191, 2
        %vm214 = vcmp.ge.s32.totalorder %v213, 0
        %vm215 = vcmp.le.s32.totalorder %v213, 15
        %vm216 = vmand %vm214, %vm215
        %v217 = vsel %vm216, 1, 0
        %v218 = vcvt.s32.f32 %v217
        %v219 = vadd.s32 %v193, 4294967264
        %v220 = vadd.s32 %v194, 4294967264
        %vm221 = vcmp.ge.s32.totalorder %v219, 0
        %vm222 = vcmp.ge.s32.totalorder %v220, 0
        %vm223 = vcmp.le.s32.totalorder %v219, 255
        %vm224 = vcmp.le.s32.totalorder %v220, 255
        %vm225 = vmand %vm221, %vm223
        %vm226 = vmand %vm222, %vm224
        %v227 = vsel %vm225, 1, 0
        %v228 = vsel %vm226, 1, 0
        %v229 = vcvt.s32.f32 %v227
        %v230 = vcvt.s32.f32 %v228
        %v231 = vadd.s32 %v193, 4294967280
        %v232 = vadd.s32 %v194, 4294967280
        %vm233 = vcmp.ge.s32.totalorder %v231, 0
        %vm234 = vcmp.ge.s32.totalorder %v232, 0
        %vm235 = vcmp.le.s32.totalorder %v231, 255
        %vm236 = vcmp.le.s32.totalorder %v232, 255
        %vm237 = vmand %vm233, %vm235
        %vm238 = vmand %vm234, %vm236
        %v239 = vsel %vm237, 1, 0
        %v240 = vsel %vm238, 1, 0
        %v241 = vcvt.s32.f32 %v239
        %v242 = vcvt.s32.f32 %v240
        %v243 = vadd.s32 %v193, 16
        %v244 = vadd.s32 %v194, 16
        %vm245 = vcmp.ge.s32.totalorder %v243, 0
        %vm246 = vcmp.ge.s32.totalorder %v244, 0
        %vm247 = vcmp.le.s32.totalorder %v243, 255
        %vm248 = vcmp.le.s32.totalorder %v244, 255
        %vm249 = vmand %vm245, %vm247
        %vm250 = vmand %vm246, %vm248
        %v251 = vsel %vm249, 1, 0
        %v252 = vsel %vm250, 1, 0
        %v253 = vcvt.s32.f32 %v251
        %v254 = vcvt.s32.f32 %v252
        %v255 = vadd.s32 %v193, 32
        %v256 = vadd.s32 %v194, 32
        %vm257 = vcmp.ge.s32.totalorder %v255, 0
        %vm258 = vcmp.ge.s32.totalorder %v256, 0
        %vm259 = vcmp.le.s32.totalorder %v255, 255
        %vm260 = vcmp.le.s32.totalorder %v256, 255
        %vm261 = vmand %vm257, %vm259
        %vm262 = vmand %vm258, %vm260
        %v263 = vsel %vm261, 1, 0
        %v264 = vsel %vm262, 1, 0
        %v265 = vcvt.s32.f32 %v263
        %v266 = vcvt.s32.f32 %v264
        %v268 = vrot.slane %v189, 5
        %v269 = vrot.slane %v268, 4
        %v271 = vadd.f32 %v189, %v269
        %v272 = vrot.slane %v189, 6
        %v273 = vrot.slane %v272, 4
        %v275 = vadd.f32 %v271, %v273
        %v276 = vmul.f32 %v275, 0.33333334
        %v278 = vlaneseq
        %v279 = vshrl.u32 %v278, 7
        %v280 = vsub.s32 0, %v279
        %v281 = vrot.slane %v276, %v280
        %v282 = vlaneseq
        %v283 = vshrl.u32 %v282, 7
        %v284 = vsub.s32 4, %v283
        %v285 = vrot.slane %v276, %v284
        %288 = vrot.lane.b32.xlu0 %v281, 16
        %v289 = vpop.permute.xlu0 %288
        %290 = vrot.lane.b32.xlu0 %v285, 16
        %v291 = vpop.permute.xlu0 %290
        %vm292 = vcmp.lt.s32.totalorder %v193, 16
        %v293 = vsel %vm292, %v289, %v291
        %v294 = vsel %vm292, %v291, %v289
        %v295 = vmul.f32 %v294, %v241
        %v296 = vmul.f32 %v293, %v242
        %v297 = vmul.f32 %v276, 2.0
        %v299 = vlaneseq
        %v300 = vshrl.u32 %v299, 7
        %v301 = vsub.s32 0, %v300
        %v302 = vrot.slane %v297, %v301
        %v303 = vlaneseq
        %v304 = vshrl.u32 %v303, 7
        %v305 = vsub.s32 4, %v304
        %v306 = vrot.slane %v297, %v305
        %v309 = vadd.f32 %v295, %v302
        %v310 = vadd.f32 %v296, %v306
        %311 = vrot.lane.b32.xlu0 %v281, 112
        %v312 = vpop.permute.xlu0 %311
        %313 = vrot.lane.b32.xlu0 %v285, 112
        %v314 = vpop.permute.xlu0 %313
        %vm315 = vcmp.lt.s32.totalorder %v193, 112
        %v316 = vsel %vm315, %v312, %v314
        %v317 = vsel %vm315, %v314, %v312
        %v318 = vmul.f32 %v316, %v253
        %v319 = vmul.f32 %v317, %v254
        %v320 = vadd.f32 %v309, %v318
        %v321 = vadd.f32 %v310, %v319
        %322 = vrot.lane.b32.xlu0 %v320, 127
        %v323 = vpop.permute.xlu0 %322
        %324 = vrot.lane.b32.xlu0 %v321, 127
        %v325 = vpop.permute.xlu0 %324
        %vm326 = vcmp.lt.s32.totalorder %v193, 127
        %v327 = vsel %vm326, %v323, %v325
        %v328 = vsel %vm326, %v325, %v323
        %v330 = vlaneseq
        %v331 = vshrl.u32 %v330, 7
        %v332 = vsub.s32 0, %v331
        %v333 = vrot.slane %v212, %v332
        %v334 = vlaneseq
        %v335 = vshrl.u32 %v334, 7
        %v336 = vsub.s32 1, %v335
        %v337 = vrot.slane %v212, %v336
        %v340 = vmul.f32 %v327, %v333
        %v341 = vmul.f32 %v328, %v337
        %342 = vrot.lane.b32.xlu0 %v320, 1
        %v343 = vpop.permute.xlu0 %342
        %344 = vrot.lane.b32.xlu0 %v321, 1
        %v345 = vpop.permute.xlu0 %344
        %vm346 = vcmp.lt.s32.totalorder %v193, 1
        %v347 = vsel %vm346, %v343, %v345
        %v348 = vsel %vm346, %v345, %v343
        %v350 = vlaneseq
        %v351 = vshrl.u32 %v350, 7
        %v352 = vsub.s32 0, %v351
        %v353 = vrot.slane %v206, %v352
        %v354 = vlaneseq
        %v355 = vshrl.u32 %v354, 7
        %v356 = vsub.s32 1, %v355
        %v357 = vrot.slane %v206, %v356
        %v360 = vmul.f32 %v348, %v353
        %v361 = vmul.f32 %v347, %v357
        %v362 = vsub.f32 %v340, %v360
        %v363 = vsub.f32 %v341, %v361
        %364 = vrot.lane.b32.xlu0 %v281, 1
        %v365 = vpop.permute.xlu0 %364
        %366 = vrot.lane.b32.xlu0 %v285, 1
        %v367 = vpop.permute.xlu0 %366
        %v368 = vsel %vm346, %v365, %v367
        %v369 = vsel %vm346, %v367, %v365
        %v370 = vmul.f32 %v369, %v353
        %v371 = vmul.f32 %v368, %v357
        %v372 = vadd.f32 %v370, %v302
        %v373 = vadd.f32 %v371, %v306
        %374 = vrot.lane.b32.xlu0 %v281, 127
        %v375 = vpop.permute.xlu0 %374
        %376 = vrot.lane.b32.xlu0 %v285, 127
        %v377 = vpop.permute.xlu0 %376
        %v378 = vsel %vm326, %v375, %v377
        %v379 = vsel %vm326, %v377, %v375
        %v380 = vmul.f32 %v378, %v333
        %v381 = vmul.f32 %v379, %v337
        %v382 = vadd.f32 %v372, %v380
        %v383 = vadd.f32 %v373, %v381
        %384 = vrot.lane.b32.xlu0 %v382, 112
        %v385 = vpop.permute.xlu0 %384
        %386 = vrot.lane.b32.xlu0 %v383, 112
        %v387 = vpop.permute.xlu0 %386
        %v388 = vsel %vm315, %v385, %v387
        %v389 = vsel %vm315, %v387, %v385
        %v390 = vmul.f32 %v388, %v253
        %v391 = vmul.f32 %v389, %v254
        %392 = vrot.lane.b32.xlu0 %v382, 16
        %v393 = vpop.permute.xlu0 %392
        %394 = vrot.lane.b32.xlu0 %v383, 16
        %v395 = vpop.permute.xlu0 %394
        %v396 = vsel %vm292, %v393, %v395
        %v397 = vsel %vm292, %v395, %v393
        %v398 = vmul.f32 %v397, %v241
        %v399 = vmul.f32 %v396, %v242
        %v400 = vsub.f32 %v390, %v398
        %v401 = vsub.f32 %v391, %v399
        %v402 = vmul.f32 %v362, %v362
        %v403 = vmul.f32 %v363, %v363
        %v404 = vmul.f32 %v400, %v400
        %v405 = vmul.f32 %v401, %v401
        %v406 = vadd.f32 %v402, %v404
        %v407 = vadd.f32 %v403, %v405
        %v408 = vrsqrt.pop %v406
        %v409 = vmul.f32 %v406, %v408
        %vm410 = vcmp.eq.f32.partialorder %v406, inf
        %v411 = vsel %vm410, %v406, %v409
        %vm412 = vcmp.eq.f32.partialorder %v406, 0.0
        %v413 = vand.u32 %v406, 2147483648
        %v414 = vsel %vm412, %v413, %v411
        %v415 = vrsqrt.pop %v407
        %v416 = vmul.f32 %v407, %v415
        %vm417 = vcmp.eq.f32.partialorder %v407, inf
        %v418 = vsel %vm417, %v407, %v416
        %vm419 = vcmp.eq.f32.partialorder %v407, 0.0
        %v420 = vand.u32 %v407, 2147483648
        %v421 = vsel %vm419, %v420, %v418
        %422 = vrot.lane.b32.xlu0 %v414, 1
        %v423 = vpop.permute.xlu0 %422
        %424 = vrot.lane.b32.xlu0 %v421, 1
        %v425 = vpop.permute.xlu0 %424
        %v426 = vsel %vm346, %v423, %v425
        %v427 = vsel %vm346, %v425, %v423
        %v428 = vmul.f32 %v427, %v353
        %v429 = vmul.f32 %v426, %v357
        %v430 = vadd.f32 %v428, %v414
        %v431 = vadd.f32 %v429, %v421
        %432 = vrot.lane.b32.xlu0 %v414, 127
        %v433 = vpop.permute.xlu0 %432
        %434 = vrot.lane.b32.xlu0 %v421, 127
        %v435 = vpop.permute.xlu0 %434
        %v436 = vsel %vm326, %v433, %v435
        %v437 = vsel %vm326, %v435, %v433
        %v438 = vmul.f32 %v436, %v333
        %v439 = vmul.f32 %v437, %v337
        %v440 = vadd.f32 %v430, %v438
        %v441 = vadd.f32 %v431, %v439
        %442 = vrot.lane.b32.xlu0 %v414, 2
        %v443 = vpop.permute.xlu0 %442
        %444 = vrot.lane.b32.xlu0 %v421, 2
        %v445 = vpop.permute.xlu0 %444
        %vm446 = vcmp.lt.s32.totalorder %v193, 2
        %v447 = vsel %vm446, %v443, %v445
        %v448 = vsel %vm446, %v445, %v443
        %v450 = vlaneseq
        %v451 = vshrl.u32 %v450, 7
        %v452 = vsub.s32 0, %v451
        %v453 = vrot.slane %v200, %v452
        %v454 = vlaneseq
        %v455 = vshrl.u32 %v454, 7
        %v456 = vsub.s32 1, %v455
        %v457 = vrot.slane %v200, %v456
        %v460 = vmul.f32 %v448, %v453
        %v461 = vmul.f32 %v447, %v457
        %v462 = vadd.f32 %v440, %v460
        %v463 = vadd.f32 %v441, %v461
        %464 = vrot.lane.b32.xlu0 %v414, 126
        %v465 = vpop.permute.xlu0 %464
        %466 = vrot.lane.b32.xlu0 %v421, 126
        %v467 = vpop.permute.xlu0 %466
        %vm468 = vcmp.lt.s32.totalorder %v193, 126
        %v469 = vsel %vm468, %v465, %v467
        %v470 = vsel %vm468, %v467, %v465
        %v472 = vlaneseq
        %v473 = vshrl.u32 %v472, 7
        %v474 = vsub.s32 0, %v473
        %v475 = vrot.slane %v218, %v474
        %v476 = vlaneseq
        %v477 = vshrl.u32 %v476, 7
        %v478 = vsub.s32 1, %v477
        %v479 = vrot.slane %v218, %v478
        %v482 = vmul.f32 %v469, %v475
        %v483 = vmul.f32 %v470, %v479
        %v484 = vadd.f32 %v462, %v482
        %v485 = vadd.f32 %v463, %v483
        %486 = vrot.lane.b32.xlu0 %v440, 16
        %v487 = vpop.permute.xlu0 %486
        %488 = vrot.lane.b32.xlu0 %v441, 16
        %v489 = vpop.permute.xlu0 %488
        %v490 = vsel %vm292, %v487, %v489
        %v491 = vsel %vm292, %v489, %v487
        %v492 = vmul.f32 %v491, %v241
        %v493 = vmul.f32 %v490, %v242
        %v494 = vadd.f32 %v492, %v440
        %v495 = vadd.f32 %v493, %v441
        %496 = vrot.lane.b32.xlu0 %v440, 112
        %v497 = vpop.permute.xlu0 %496
        %498 = vrot.lane.b32.xlu0 %v441, 112
        %v499 = vpop.permute.xlu0 %498
        %v500 = vsel %vm315, %v497, %v499
        %v501 = vsel %vm315, %v499, %v497
        %v502 = vmul.f32 %v500, %v253
        %v503 = vmul.f32 %v501, %v254
        %v504 = vadd.f32 %v494, %v502
        %v505 = vadd.f32 %v495, %v503
        %506 = vrot.lane.b32.xlu0 %v484, 32
        %v507 = vpop.permute.xlu0 %506
        %508 = vrot.lane.b32.xlu0 %v485, 32
        %v509 = vpop.permute.xlu0 %508
        %vm510 = vcmp.lt.s32.totalorder %v193, 32
        %v511 = vsel %vm510, %v507, %v509
        %v512 = vsel %vm510, %v509, %v507
        %v513 = vmul.f32 %v512, %v229
        %v514 = vmul.f32 %v511, %v230
        %515 = vrot.lane.b32.xlu0 %v484, 16
        %v516 = vpop.permute.xlu0 %515
        %517 = vrot.lane.b32.xlu0 %v485, 16
        %v518 = vpop.permute.xlu0 %517
        %v519 = vsel %vm292, %v516, %v518
        %v520 = vsel %vm292, %v518, %v516
        %v521 = vmul.f32 %v520, %v241
        %v522 = vmul.f32 %v519, %v242
        %v523 = vadd.f32 %v513, %v521
        %v524 = vadd.f32 %v514, %v522
        %v525 = vadd.f32 %v523, %v484
        %v526 = vadd.f32 %v524, %v485
        %527 = vrot.lane.b32.xlu0 %v484, 112
        %v528 = vpop.permute.xlu0 %527
        %529 = vrot.lane.b32.xlu0 %v485, 112
        %v530 = vpop.permute.xlu0 %529
        %v531 = vsel %vm315, %v528, %v530
        %v532 = vsel %vm315, %v530, %v528
        %v533 = vmul.f32 %v531, %v253
        %v534 = vmul.f32 %v532, %v254
        %v535 = vadd.f32 %v525, %v533
        %v536 = vadd.f32 %v526, %v534
        %537 = vrot.lane.b32.xlu0 %v484, 96
        %v538 = vpop.permute.xlu0 %537
        %539 = vrot.lane.b32.xlu0 %v485, 96
        %v540 = vpop.permute.xlu0 %539
        %vm541 = vcmp.lt.s32.totalorder %v193, 96
        %v542 = vsel %vm541, %v538, %v540
        %v543 = vsel %vm541, %v540, %v538
        %v544 = vmul.f32 %v542, %v265
        %v545 = vmul.f32 %v543, %v266
        %v546 = vadd.f32 %v535, %v544
        %v547 = vadd.f32 %v536, %v545
        %v548 = vmul.f32 %v546, 0.04
        %v549 = vmul.f32 %v547, 0.04
        %v550 = vmul.f32 %v504, 0.06
        %v551 = vmul.f32 %v505, 0.06
        %v552 = vadd.f32 %v548, %v550
        %v553 = vadd.f32 %v549, %v551
        %v554 = vmul.f32 %v414, 0.1
        %v555 = vmul.f32 %v421, 0.1
        %v556 = vadd.f32 %v552, %v554
        %v557 = vadd.f32 %v553, %v555
        %558 = vrot.lane.b32.xlu0 %v556, 1
        %v559 = vpop.permute.xlu0 %558
        %560 = vrot.lane.b32.xlu0 %v557, 1
        %v561 = vpop.permute.xlu0 %560
        %v562 = vsel %vm346, %v559, %v561
        %v563 = vsel %vm346, %v561, %v559
        %v564 = vmul.f32 %v563, %v353
        %v565 = vmul.f32 %v562, %v357
        %v566 = vadd.f32 %v564, %v556
        %v567 = vadd.f32 %v565, %v557
        %568 = vrot.lane.b32.xlu0 %v556, 127
        %v569 = vpop.permute.xlu0 %568
        %570 = vrot.lane.b32.xlu0 %v557, 127
        %v571 = vpop.permute.xlu0 %570
        %v572 = vsel %vm326, %v569, %v571
        %v573 = vsel %vm326, %v571, %v569
        %v574 = vmul.f32 %v572, %v333
        %v575 = vmul.f32 %v573, %v337
        %v576 = vadd.f32 %v566, %v574
        %v577 = vadd.f32 %v567, %v575
        %578 = vrot.lane.b32.xlu0 %v556, 2
        %v579 = vpop.permute.xlu0 %578
        %580 = vrot.lane.b32.xlu0 %v557, 2
        %v581 = vpop.permute.xlu0 %580
        %v582 = vsel %vm446, %v579, %v581
        %v583 = vsel %vm446, %v581, %v579
        %v584 = vmul.f32 %v583, %v453
        %v585 = vmul.f32 %v582, %v457
        %v586 = vadd.f32 %v576, %v584
        %v587 = vadd.f32 %v577, %v585
        %588 = vrot.lane.b32.xlu0 %v556, 126
        %v589 = vpop.permute.xlu0 %588
        %590 = vrot.lane.b32.xlu0 %v557, 126
        %v591 = vpop.permute.xlu0 %590
        %v592 = vsel %vm468, %v589, %v591
        %v593 = vsel %vm468, %v591, %v589
        %v594 = vmul.f32 %v592, %v475
        %v595 = vmul.f32 %v593, %v479
        %v596 = vadd.f32 %v586, %v594
        %v597 = vadd.f32 %v587, %v595
        %598 = vrot.lane.b32.xlu0 %v576, 16
        %v599 = vpop.permute.xlu0 %598
        %600 = vrot.lane.b32.xlu0 %v577, 16
        %v601 = vpop.permute.xlu0 %600
        %v602 = vsel %vm292, %v599, %v601
        %v603 = vsel %vm292, %v601, %v599
        %v604 = vmul.f32 %v603, %v241
        %v605 = vmul.f32 %v602, %v242
        %v606 = vadd.f32 %v604, %v576
        %v607 = vadd.f32 %v605, %v577
        %608 = vrot.lane.b32.xlu0 %v576, 112
        %v609 = vpop.permute.xlu0 %608
        %610 = vrot.lane.b32.xlu0 %v577, 112
        %v611 = vpop.permute.xlu0 %610
        %v612 = vsel %vm315, %v609, %v611
        %v613 = vsel %vm315, %v611, %v609
        %v614 = vmul.f32 %v612, %v253
        %v615 = vmul.f32 %v613, %v254
        %v616 = vadd.f32 %v606, %v614
        %v617 = vadd.f32 %v607, %v615
        %618 = vrot.lane.b32.xlu0 %v596, 32
        %v619 = vpop.permute.xlu0 %618
        %620 = vrot.lane.b32.xlu0 %v597, 32
        %v621 = vpop.permute.xlu0 %620
        %v622 = vsel %vm510, %v619, %v621
        %v623 = vsel %vm510, %v621, %v619
        %v624 = vmul.f32 %v623, %v229
        %v625 = vmul.f32 %v622, %v230
        %626 = vrot.lane.b32.xlu0 %v596, 16
        %v627 = vpop.permute.xlu0 %626
        %628 = vrot.lane.b32.xlu0 %v597, 16
        %v629 = vpop.permute.xlu0 %628
        %v630 = vsel %vm292, %v627, %v629
        %v631 = vsel %vm292, %v629, %v627
        %v632 = vmul.f32 %v631, %v241
        %v633 = vmul.f32 %v630, %v242
        %v634 = vadd.f32 %v624, %v632
        %v635 = vadd.f32 %v625, %v633
        %v636 = vadd.f32 %v634, %v596
        %v637 = vadd.f32 %v635, %v597
        %638 = vrot.lane.b32.xlu0 %v596, 112
        %v639 = vpop.permute.xlu0 %638
        %640 = vrot.lane.b32.xlu0 %v597, 112
        %v641 = vpop.permute.xlu0 %640
        %v642 = vsel %vm315, %v639, %v641
        %v643 = vsel %vm315, %v641, %v639
        %v644 = vmul.f32 %v642, %v253
        %v645 = vmul.f32 %v643, %v254
        %v646 = vadd.f32 %v636, %v644
        %v647 = vadd.f32 %v637, %v645
        %648 = vrot.lane.b32.xlu0 %v596, 96
        %v649 = vpop.permute.xlu0 %648
        %650 = vrot.lane.b32.xlu0 %v597, 96
        %v651 = vpop.permute.xlu0 %650
        %v652 = vsel %vm541, %v649, %v651
        %v653 = vsel %vm541, %v651, %v649
        %v654 = vmul.f32 %v652, %v265
        %v655 = vmul.f32 %v653, %v266
        %v656 = vadd.f32 %v646, %v654
        %v657 = vadd.f32 %v647, %v655
        %v658 = vmul.f32 %v656, 0.04
        %v659 = vmul.f32 %v657, 0.04
        %v660 = vmul.f32 %v616, 0.06
        %v661 = vmul.f32 %v617, 0.06
        %v662 = vadd.f32 %v658, %v660
        %v663 = vadd.f32 %v659, %v661
        %v664 = vmul.f32 %v556, 0.1
        %v665 = vmul.f32 %v557, 0.1
        %v666 = vadd.f32 %v662, %v664
        %v667 = vadd.f32 %v663, %v665
        %v668 = vmax.f32 %v666, 0.2
        %v669 = vmax.f32 %v667, 0.2
        %v670 = vmin.f32 %v668, 0.95
        %v671 = vmin.f32 %v669, 0.95
        %v672 = vsub.f32 1.0, %v670
        %v673 = vsub.f32 1.0, %v671
        %v674 = vsub.f32 %v189, %v190
        %v675 = vand.u32 2147483647, %v674
        %v676 = vlaneseq
        %v677 = vshrl.u32 %v676, 7
        %v678 = vsub.s32 0, %v677
        %v679 = vrot.slane %v670, %v678
        %v680 = vlaneseq
        %v681 = vshrl.u32 %v680, 7
        %v682 = vsub.s32 0, %v681
        %v683 = vrot.slane %v671, %v682
        %v686 = vcombine.low %v679, %v683
        %v688 = vmul.f32 %v675, %v686
        %v690 = vcombine.high %v688, %v688
        %vm692 = vcmask 1042432
        %v693 = vsel %vm692, %v688, 0.0
        %v694 = vsel %vm692, %v690, 0.0
        %v695 = vadd.f32 %v693, %v694
        %696 = vadd.xlane.f32.xlu0 %v695
        %v697 = vpop.xlane.xlu0 %696
        %v698 = vrot.slane %v697, 4
        %v699 = vadd.f32 %v697, %v698
        %v700 = vrot.slane %v699, 2
        %v701 = vadd.f32 %v699, %v700
        %v702 = vrot.slane %v701, 1
        %v703 = vadd.f32 %v701, %v702
        %s704 = vtos %v703
        %vm705 = vcmask 1040384
        %v706 = vsel %vm705, %v670, 0.0
        %v707 = vsel %vm705, %v671, 0.0
        %v708 = vadd.f32 %v706, %v707
        %709 = vadd.xlane.f32.xlu0 %v708
        %v710 = vpop.xlane.xlu0 %709
        %v711 = vrot.slane %v710, 4
        %v712 = vadd.f32 %v710, %v711
        %v713 = vrot.slane %v712, 2
        %v714 = vadd.f32 %v712, %v713
        %v715 = vrot.slane %v714, 1
        %v716 = vadd.f32 %v714, %v715
        %s717 = vtos %v716
        %v719 = vcombine.high %v190, %v190
        %721 = vrot.lane.b32.xlu0 %v190, 1
        %v722 = vpop.permute.xlu0 %721
        %723 = vrot.lane.b32.xlu0 %v719, 1
        %v724 = vpop.permute.xlu0 %723
        %v725 = vsel %vm346, %v722, %v724
        %v726 = vsel %vm346, %v724, %v722
        %v727 = vmul.f32 %v726, %v353
        %v728 = vmul.f32 %v725, %v357
        %v731 = vcombine.low %v727, %v728
        %v733 = vsub.f32 %v190, %v731
        %v734 = vcombine.low %v353, %v357
        %v736 = vmul.f32 %v733, %v734
        %737 = vrot.lane.b32.xlu0 %v190, 127
        %v738 = vpop.permute.xlu0 %737
        %739 = vrot.lane.b32.xlu0 %v719, 127
        %v740 = vpop.permute.xlu0 %739
        %v741 = vsel %vm326, %v738, %v740
        %v742 = vsel %vm326, %v740, %v738
        %v743 = vmul.f32 %v741, %v333
        %v744 = vmul.f32 %v742, %v337
        %v747 = vcombine.low %v743, %v744
        %v749 = vsub.f32 %v190, %v747
        %v750 = vcombine.low %v333, %v337
        %v752 = vmul.f32 %v749, %v750
        %v753 = vadd.f32 %v736, %v752
        %v754 = vmul.f32 %v753, 0.5
        %755 = vrot.lane.b32.xlu0 %v190, 112
        %v756 = vpop.permute.xlu0 %755
        %757 = vrot.lane.b32.xlu0 %v719, 112
        %v758 = vpop.permute.xlu0 %757
        %v759 = vsel %vm315, %v756, %v758
        %v760 = vsel %vm315, %v758, %v756
        %v761 = vmul.f32 %v759, %v253
        %v762 = vmul.f32 %v760, %v254
        %v765 = vcombine.low %v761, %v762
        %v767 = vsub.f32 %v190, %v765
        %v770 = vcombine.low %v253, %v254
        %v772 = vmul.f32 %v767, %v770
        %773 = vrot.lane.b32.xlu0 %v190, 16
        %v774 = vpop.permute.xlu0 %773
        %775 = vrot.lane.b32.xlu0 %v719, 16
        %v776 = vpop.permute.xlu0 %775
        %v777 = vsel %vm292, %v774, %v776
        %v778 = vsel %vm292, %v776, %v774
        %v779 = vmul.f32 %v778, %v241
        %v780 = vmul.f32 %v777, %v242
        %v783 = vcombine.low %v779, %v780
        %v785 = vsub.f32 %v190, %v783
        %v788 = vcombine.low %v241, %v242
        %v790 = vmul.f32 %v785, %v788
        %v791 = vadd.f32 %v772, %v790
        %v792 = vmul.f32 %v791, 0.5
        %v793 = vadd.f32 %v754, %v792
        %v794 = vmul.f32 %v793, 0.5
        %v795 = vlaneseq
        %v796 = vshrl.u32 %v795, 7
        %v797 = vsub.s32 0, %v796
        %v798 = vrot.slane %v672, %v797
        %v799 = vlaneseq
        %v800 = vshrl.u32 %v799, 7
        %v801 = vsub.s32 0, %v800
        %v802 = vrot.slane %v673, %v801
        %v805 = vcombine.low %v798, %v802
        %v807 = vmul.f32 %v794, %v805
        %v808 = vand.u32 2147483647, %v807
        %v810 = vcombine.high %v808, %v808
        %v812 = vsel %vm692, %v808, 0.0
        %v813 = vsel %vm692, %v810, 0.0
        %v814 = vadd.f32 %v812, %v813
        %815 = vadd.xlane.f32.xlu0 %v814
        %v816 = vpop.xlane.xlu0 %815
        %v817 = vrot.slane %v816, 4
        %v818 = vadd.f32 %v816, %v817
        %v819 = vrot.slane %v818, 2
        %v820 = vadd.f32 %v818, %v819
        %v821 = vrot.slane %v820, 1
        %v822 = vadd.f32 %v820, %v821
        %s823 = vtos %v822
        %v824 = vlaneseq
        %v825 = vshrl.u32 %v824, 7
        %vm826 = vcmp.eq.s32.totalorder %v825, 0
        %vm827 = vcmp.eq.s32.totalorder %v825, 1
        %v828 = vstv %s717
        %v829 = vstv %s823
        %v830 = vsel %vm827, %v828, %v829
        %v831 = vstv %s704
        %v832 = vsel %vm826, %v831, %v830
        %833 = vst [vmem:[%s178] sm:$0xff] %v832
        %s834 = sand.u32 %s98, 1
        %s835 = scalar_lea.sflag [#allocation3], %s834
        %s836 = sand.u32 %s98, 1
        %s837 = smul.addr %s836, 8
        %s838 = scalar_lea.vmem [#allocation2], %s837
        // Predicated region
        $region33: #{tpu_custom_call.1} parent=31 // pred_check
          %p839 = pneg %p108
        $region34: #{tpu_custom_call.1} parent=31 // pred_check_branch
          %841 = sbr.rel (%p839) target = $region36
        $region35: #{tpu_custom_call.1} parent=31 // pred_region
          %s843 = ssub.s32 128, 128
          %844 = vsyncadd %s835, %s843
          %s845 = smul.addr %s17, 128
          %s846 = scalar_lea.hbm %s3, %s845
          %s848 = sshll.u32 %s838, 4
          %s849 = int_to_ptr.vmem [resolvable:$true] %s848
          %851 = dma.vmem_to_hbm [thread:$0]  %s849, 128, %s846, %s835
        $region36: #{tpu_custom_call.1} parent=31 // pred_fallthru
          _
      $region32: #{tpu_custom_call.1} parent=5 // pred_fallthru
        _
      %p852 = scmp.le.s32.totalorder 2, %s12
      // Predicated region
      $region37: #{tpu_custom_call.1} parent=5 // pred_check
        %p853 = pneg %p852
      $region38: #{tpu_custom_call.1} parent=5 // pred_check_branch
        %855 = sbr.rel (%p853) target = $region40
      $region39: #{tpu_custom_call.1} parent=5 // pred_region
        %s856 = ssub.s32 %s12, 2
        // Predicated region
        $region41: #{tpu_custom_call.1} parent=39 // pred_check
          %p857 = pneg %p114
        $region42: #{tpu_custom_call.1} parent=39 // pred_check_branch
          %859 = sbr.rel (%p857) target = $region44
        $region43: #{tpu_custom_call.1} parent=39 // pred_region
          %s860 = sand.u32 %s99, 1
          %s861 = scalar_lea.sflag [#allocation3], %s860
          %s862 = sand.u32 %s99, 1
          %s863 = smul.addr %s862, 8
          %s864 = scalar_lea.vmem [#allocation2], %s863
          %865 = dma.done %s861, 128
        $region44: #{tpu_custom_call.1} parent=39 // pred_fallthru
          _
      $region40: #{tpu_custom_call.1} parent=5 // pred_fallthru
        _
    $region6: #{tpu_custom_call.1} parent=1 // loop_footer
      %s16 = sadd.s32 1, %s12
    $region7: #{tpu_custom_call.1} parent=1 // loop_footer_branch
      %11 = sbr.rel target = $region3
    $region8: #{tpu_custom_call.1} parent=1 // loop_exit
      _
    %866 = vsyncpa [#allocation3], 1
    %s867 = scalar_lea.sflag [#allocation3], 1
    %868 = vsyncpa %s867, 1

</llo_original>
